<compile_context>
chip_gen: v5e
topology: v5e:2x2
jax: 0.10.0
libtpu: 0.0.40
codegen_flags: <defaults>
</compile_context>

<pallas_src>
import jax
import jax.numpy as jnp
import numpy as np
from jax.experimental import pallas as pl
from jax.experimental.pallas import tpu as pltpu

_N_STATS = 8      # per-plane statistics produced by the kernel
_ROW_CHUNK = 8    # planes per inner-loop step (one f32 sublane tile)


def _round_up(x, m):
    return (x + m - 1) // m * m


def _make_stats_kernel(H, W, block_rows):
    """Kernel over (block_rows, H*W) blocks; one row == one flattened plane.

    out_ref[r, :] = [ sum|p-t|,
                      sum|grad_H(p-t)|, sum|grad_W(p-t)|,
                      sum p, sum p^2, sum t, sum t^2,
                      sum relu(|p| - 1) ]   for plane r of the block.
    """
    HW = H * W
    CH = _ROW_CHUNK
    n_chunks = block_rows // CH

    def kernel(p_ref, t_ref, out_ref):
        # Valid W-gradient pairs (flat i, i+1) exclude row-wrap positions
        # (i % W == W-1). Hoisted out of the chunk loop (loop-invariant).
        col = jax.lax.broadcasted_iota(jnp.int32, (CH, HW - 1), 1)
        w_mask = (col % W) != (W - 1)

        def body(c, carry):
            r0 = pl.multiple_of(c * CH, CH)
            p = p_ref[pl.ds(r0, CH), :].astype(jnp.float32)   # (CH, HW)
            t = t_ref[pl.ds(r0, CH), :].astype(jnp.float32)
            d = p - t

            # Single pass over the vreg-resident chunk for all 8 statistics.
            abs_d = jnp.abs(d)
            # H-gradient of the difference: d[h, w] - d[h+1, w]  == flat (i, i+W)
            gx = jnp.abs(d[:, : HW - W] - d[:, W:])
            # W-gradient: d[h, w] - d[h, w+1] == flat (i, i+1), drop row wraps.
            gy = jnp.where(w_mask, jnp.abs(d[:, : HW - 1] - d[:, 1:]), 0.0)
            relu_p = jnp.maximum(jnp.abs(p) - 1.0, 0.0)

            def rsum(x):
                return jnp.sum(x, axis=1, keepdims=True)      # (CH, 1)

            cols = (rsum(abs_d), rsum(gx), rsum(gy),
                    rsum(p), rsum(p * p), rsum(t), rsum(t * t),
                    rsum(relu_p))
            for k, v in enumerate(cols):
                out_ref[pl.ds(r0, CH), pl.ds(k, 1)] = v
            return carry

        jax.lax.fori_loop(0, n_chunks, body, 0)

    return kernel


def amsr2_specific_loss(pred, target, alpha: float = 1.0, beta: float = 0.15,
                        gamma: float = 0.05):
    """Mirrors AMSR2SpecificLoss.forward: returns (total_loss, dict of scalars)."""
    B, C, H, W = pred.shape
    N = B * C
    HW = H * W

    # Lane-dense, layout-preserving view; keep the input dtype (cast on-chip).
    p = pred.reshape(N, HW)
    t = target.reshape(N, HW)

    # Planes per grid step: large enough to amortize per-step overhead, small
    # enough that 2 inputs x 2 pipeline buffers stay well under the v5e 16 MiB
    # scoped-VMEM default (also comfortable for v7x's 64 MiB physical VMEM).
    itemsize = pred.dtype.itemsize
    target_block_bytes = 2 * 1024 * 1024
    rows_cap = max(_ROW_CHUNK,
                   (target_block_bytes // (HW * itemsize))
                   // _ROW_CHUNK * _ROW_CHUNK)
    block_rows = min(_round_up(N, _ROW_CHUNK), rows_cap)
    n_pad = _round_up(N, block_rows)
    # TODO(synk): planes with H*W*itemsize >~ 2 MiB need an extra tiling along
    # H*W with cross-step accumulation; not required for these shapes.
    if n_pad != N:
        p = jnp.pad(p, ((0, n_pad - N), (0, 0)))
        t = jnp.pad(t, ((0, n_pad - N), (0, 0)))

    stats = pl.pallas_call(
        _make_stats_kernel(H, W, block_rows),
        grid=(n_pad // block_rows,),
        in_specs=[
            pl.BlockSpec((block_rows, HW), lambda i: (i, 0)),
            pl.BlockSpec((block_rows, HW), lambda i: (i, 0)),
        ],
        out_specs=pl.BlockSpec((block_rows, _N_STATS), lambda i: (i, 0)),
        out_shape=jax.ShapeDtypeStruct((n_pad, _N_STATS), jnp.float32),
        compiler_params=pltpu.CompilerParams(
            dimension_semantics=("parallel",)),
    )(p, t)

    stats = stats[:N]
    sum_abs, sum_gx, sum_gy = stats[:, 0], stats[:, 1], stats[:, 2]
    sp, sp2, st, st2 = stats[:, 3], stats[:, 4], stats[:, 5], stats[:, 6]
    sum_relu = stats[:, 7]

    n_elem = N * HW

    # L1 loss: mean over all B*C*H*W elements.
    l1_loss = jnp.sum(sum_abs) / n_elem

    # Gradient loss: mean over (B,C,H-1,W) + mean over (B,C,H,W-1).
    loss_x = jnp.sum(sum_gx) / (N * (H - 1) * W)
    loss_y = jnp.sum(sum_gy) / (N * H * (W - 1))
    grad_loss = loss_x + loss_y

    # Brightness-temperature consistency.
    pred_mean = sp / HW
    target_mean = st / HW
    energy_loss = jnp.mean((pred_mean - target_mean) ** 2)

    # torch.std over dims [2,3] is unbiased (ddof=1).
    # TODO(synk): sum/sum^2 moments are f32-fragile for large-mean physical
    # temperatures over very large planes; switch to shifted moments there.
    pred_var = jnp.maximum(sp2 - sp * sp / HW, 0.0) / (HW - 1)
    target_var = jnp.maximum(st2 - st * st / HW, 0.0) / (HW - 1)
    distribution_loss = jnp.mean(
        (jnp.sqrt(pred_var) - jnp.sqrt(target_var)) ** 2)

    range_penalty = jnp.sum(sum_relu) / n_elem
    phys_loss = energy_loss + 0.5 * distribution_loss + 0.1 * range_penalty

    total_loss = alpha * l1_loss + beta * grad_loss + gamma * phys_loss

    # JAX scalars (jit-safe; no forced device->host syncs). torch's .item()
    # host pull has no in-graph equivalent and is intentionally not replicated.
    loss_dict = {
        'l1_loss': l1_loss,
        'gradient_loss': grad_loss,
        'physical_loss': phys_loss,
        'total_loss': total_loss,
    }
    return total_loss, loss_dict


def _reference_loss(pred, target, alpha=1.0, beta=0.15, gamma=0.05):
    """Pure-JAX reference matching the PyTorch semantics (for validation)."""
    l1 = jnp.mean(jnp.abs(pred - target))
    pgx = pred[:, :, :-1, :] - pred[:, :, 1:, :]
    pgy = pred[:, :, :, :-1] - pred[:, :, :, 1:]
    tgx = target[:, :, :-1, :] - target[:, :, 1:, :]
    tgy = target[:, :, :, :-1] - target[:, :, :, 1:]
    grad = jnp.mean(jnp.abs(pgx - tgx)) + jnp.mean(jnp.abs(pgy - tgy))
    pm = jnp.mean(pred, axis=(2, 3))
    tm = jnp.mean(target, axis=(2, 3))
    energy = jnp.mean((pm - tm) ** 2)
    ps = jnp.std(pred, axis=(2, 3), ddof=1)
    ts = jnp.std(target, axis=(2, 3), ddof=1)
    dist = jnp.mean((ps - ts) ** 2)
    rng = jnp.mean(jnp.maximum(jnp.abs(pred) - 1.0, 0.0))
    phys = energy + 0.5 * dist + 0.1 * rng
    return alpha * l1 + beta * grad + gamma * phys


if __name__ == "__main__":
    key = jax.random.PRNGKey(0)
    k1, k2 = jax.random.split(key)
    B, C, H, W = 2, 4, 16, 16
    pred = jax.random.normal(k1, (B, C, H, W), dtype=jnp.float32)
    target = jax.random.normal(k2, (B, C, H, W), dtype=jnp.float32)

    loss_fn = jax.jit(amsr2_specific_loss)   # whole wrapper is jit-safe now
    total_loss, loss_dict = loss_fn(pred, target)
    total_loss = jax.block_until_ready(total_loss)

    ref_total = jax.block_until_ready(_reference_loss(pred, target))
    np.testing.assert_allclose(float(total_loss), float(ref_total),
                               rtol=1e-3, atol=1e-4)

    print("KERNEL_OK")
</pallas_src>

<mosaic_0001>
module attributes {stable_mosaic.version = 11 : i64} {
  func.func @kernel(%arg0: i32, %arg1: memref<8x256xf32, #tpu.memory_space<vmem>>, %arg2: memref<8x256xf32, #tpu.memory_space<vmem>>, %arg3: memref<8x8xf32, #tpu.memory_space<vmem>>) attributes {dimension_semantics = [#tpu.dimension_semantics<parallel>], iteration_bounds = array<i64: 1>, scalar_prefetch = 0 : i64, scratch_operands = 0 : i64, tpu.core_type = #tpu.core_type<tc>, window_params = [{transform_indices = @transform_0, window_bounds = array<i64: 8, 256>}, {transform_indices = @transform_1, window_bounds = array<i64: 8, 256>}, {transform_indices = @transform_2, window_bounds = array<i64: 8, 8>}]} {
    %0 = tpu.iota {dimensions = array<i32: 1>} : vector<8x255xi32>
    %c16_i32 = arith.constant 16 : i32
    %c0_i32 = arith.constant 0 : i32
    %1 = arith.cmpi eq, %c16_i32, %c0_i32 : i32
    %c1_i32 = arith.constant 1 : i32
    %2 = arith.select %1, %c1_i32, %c16_i32 : i32
    %3 = vector.broadcast %2 : i32 to vector<8x255xi32>
    %4 = arith.remsi %0, %3 : vector<8x255xi32>
    %c0_i32_0 = arith.constant 0 : i32
    %5 = vector.broadcast %c0_i32_0 : i32 to vector<8x255xi32>
    %6 = arith.cmpi ne, %4, %5 : vector<8x255xi32>
    %c0_i32_1 = arith.constant 0 : i32
    %7 = vector.broadcast %c0_i32_1 : i32 to vector<8x255xi32>
    %8 = arith.cmpi slt, %4, %7 : vector<8x255xi32>
    %c0_i32_2 = arith.constant 0 : i32
    %9 = arith.cmpi slt, %2, %c0_i32_2 : i32
    %10 = vector.broadcast %9 : i1 to vector<8x255xi1>
    %11 = vector.broadcast %10 : vector<8x255xi1> to vector<8x255xi1>
    %12 = arith.xori %8, %11 : vector<8x255xi1>
    %13 = arith.andi %12, %6 : vector<8x255xi1>
    %14 = vector.broadcast %2 : i32 to vector<8x255xi32>
    %15 = arith.addi %4, %14 : vector<8x255xi32>
    %16 = arith.select %13, %15, %4 : vector<8x255xi1>, vector<8x255xi32>
    %c15_i32 = arith.constant 15 : i32
    %17 = vector.broadcast %c15_i32 : i32 to vector<8x255xi32>
    %18 = arith.cmpi ne, %16, %17 : vector<8x255xi32>
    %c0_i32_3 = arith.constant 0 : i32
    %c8_i32 = arith.constant 8 : i32
    %19 = arith.muli %c0_i32_3, %c8_i32 : i32
    %20 = tpu.assume_multiple %19, 8 : i32
    %21 = arith.index_cast %20 : i32 to index
    %c0 = arith.constant 0 : index
    %22 = vector.load %arg1[%21, %c0] : memref<8x256xf32, #tpu.memory_space<vmem>>, vector<8x256xf32>
    %23 = arith.index_cast %20 : i32 to index
    %c0_4 = arith.constant 0 : index
    %24 = vector.load %arg2[%23, %c0_4] : memref<8x256xf32, #tpu.memory_space<vmem>>, vector<8x256xf32>
    %25 = arith.subf %22, %24 : vector<8x256xf32>
    %26 = math.absf %25 : vector<8x256xf32>
    %27 = vector.extract_strided_slice %25 {offsets = [0, 0], sizes = [8, 240], strides = [1, 1]} : vector<8x256xf32> to vector<8x240xf32>
    %28 = vector.extract_strided_slice %25 {offsets = [0, 16], sizes = [8, 240], strides = [1, 1]} : vector<8x256xf32> to vector<8x240xf32>
    %29 = arith.subf %27, %28 : vector<8x240xf32>
    %30 = math.absf %29 : vector<8x240xf32>
    %31 = vector.extract_strided_slice %25 {offsets = [0, 0], sizes = [8, 255], strides = [1, 1]} : vector<8x256xf32> to vector<8x255xf32>
    %32 = vector.extract_strided_slice %25 {offsets = [0, 1], sizes = [8, 255], strides = [1, 1]} : vector<8x256xf32> to vector<8x255xf32>
    %33 = arith.subf %31, %32 : vector<8x255xf32>
    %34 = math.absf %33 : vector<8x255xf32>
    %cst = arith.constant 0.000000e+00 : f32
    %35 = vector.broadcast %cst : f32 to vector<8x255xf32>
    %36 = arith.select %18, %34, %35 : vector<8x255xi1>, vector<8x255xf32>
    %37 = math.absf %22 : vector<8x256xf32>
    %cst_5 = arith.constant 1.000000e+00 : f32
    %38 = vector.broadcast %cst_5 : f32 to vector<8x256xf32>
    %39 = arith.subf %37, %38 : vector<8x256xf32>
    %cst_6 = arith.constant 0.000000e+00 : f32
    %40 = vector.broadcast %cst_6 : f32 to vector<8x256xf32>
    %41 = arith.maximumf %39, %40 : vector<8x256xf32>
    %cst_7 = arith.constant dense<0.000000e+00> : vector<8xf32>
    %42 = vector.multi_reduction <add>, %26, %cst_7 [1] : vector<8x256xf32> to vector<8xf32>
    %43 = vector.shape_cast %42 : vector<8xf32> to vector<8x1xf32>
    %cst_8 = arith.constant dense<0.000000e+00> : vector<8xf32>
    %44 = vector.multi_reduction <add>, %30, %cst_8 [1] : vector<8x240xf32> to vector<8xf32>
    %45 = vector.shape_cast %44 : vector<8xf32> to vector<8x1xf32>
    %cst_9 = arith.constant dense<0.000000e+00> : vector<8xf32>
    %46 = vector.multi_reduction <add>, %36, %cst_9 [1] : vector<8x255xf32> to vector<8xf32>
    %47 = vector.shape_cast %46 : vector<8xf32> to vector<8x1xf32>
    %cst_10 = arith.constant dense<0.000000e+00> : vector<8xf32>
    %48 = vector.multi_reduction <add>, %22, %cst_10 [1] : vector<8x256xf32> to vector<8xf32>
    %49 = vector.shape_cast %48 : vector<8xf32> to vector<8x1xf32>
    %50 = arith.mulf %22, %22 : vector<8x256xf32>
    %cst_11 = arith.constant dense<0.000000e+00> : vector<8xf32>
    %51 = vector.multi_reduction <add>, %50, %cst_11 [1] : vector<8x256xf32> to vector<8xf32>
    %52 = vector.shape_cast %51 : vector<8xf32> to vector<8x1xf32>
    %cst_12 = arith.constant dense<0.000000e+00> : vector<8xf32>
    %53 = vector.multi_reduction <add>, %24, %cst_12 [1] : vector<8x256xf32> to vector<8xf32>
    %54 = vector.shape_cast %53 : vector<8xf32> to vector<8x1xf32>
    %55 = arith.mulf %24, %24 : vector<8x256xf32>
    %cst_13 = arith.constant dense<0.000000e+00> : vector<8xf32>
    %56 = vector.multi_reduction <add>, %55, %cst_13 [1] : vector<8x256xf32> to vector<8xf32>
    %57 = vector.shape_cast %56 : vector<8xf32> to vector<8x1xf32>
    %cst_14 = arith.constant dense<0.000000e+00> : vector<8xf32>
    %58 = vector.multi_reduction <add>, %41, %cst_14 [1] : vector<8x256xf32> to vector<8xf32>
    %59 = vector.shape_cast %58 : vector<8xf32> to vector<8x1xf32>
    %60 = arith.index_cast %20 : i32 to index
    %c0_15 = arith.constant 0 : index
    %61 = vector.load %arg3[%60, %c0_15] : memref<8x8xf32, #tpu.memory_space<vmem>>, vector<8x1xf32>
    tpu.vector_store %arg3[%60, %c0_15], %43 {strides = array<i32>} : memref<8x8xf32, #tpu.memory_space<vmem>>, vector<8x1xf32>,
    %62 = arith.index_cast %20 : i32 to index
    %c1 = arith.constant 1 : index
    %63 = vector.load %arg3[%62, %c1] : memref<8x8xf32, #tpu.memory_space<vmem>>, vector<8x1xf32>
    tpu.vector_store %arg3[%62, %c1], %45 {strides = array<i32>} : memref<8x8xf32, #tpu.memory_space<vmem>>, vector<8x1xf32>,
    %64 = arith.index_cast %20 : i32 to index
    %c2 = arith.constant 2 : index
    %65 = vector.load %arg3[%64, %c2] : memref<8x8xf32, #tpu.memory_space<vmem>>, vector<8x1xf32>
    tpu.vector_store %arg3[%64, %c2], %47 {strides = array<i32>} : memref<8x8xf32, #tpu.memory_space<vmem>>, vector<8x1xf32>,
    %66 = arith.index_cast %20 : i32 to index
    %c3 = arith.constant 3 : index
    %67 = vector.load %arg3[%66, %c3] : memref<8x8xf32, #tpu.memory_space<vmem>>, vector<8x1xf32>
    tpu.vector_store %arg3[%66, %c3], %49 {strides = array<i32>} : memref<8x8xf32, #tpu.memory_space<vmem>>, vector<8x1xf32>,
    %68 = arith.index_cast %20 : i32 to index
    %c4 = arith.constant 4 : index
    %69 = vector.load %arg3[%68, %c4] : memref<8x8xf32, #tpu.memory_space<vmem>>, vector<8x1xf32>
    tpu.vector_store %arg3[%68, %c4], %52 {strides = array<i32>} : memref<8x8xf32, #tpu.memory_space<vmem>>, vector<8x1xf32>,
    %70 = arith.index_cast %20 : i32 to index
    %c5 = arith.constant 5 : index
    %71 = vector.load %arg3[%70, %c5] : memref<8x8xf32, #tpu.memory_space<vmem>>, vector<8x1xf32>
    tpu.vector_store %arg3[%70, %c5], %54 {strides = array<i32>} : memref<8x8xf32, #tpu.memory_space<vmem>>, vector<8x1xf32>,
    %72 = arith.index_cast %20 : i32 to index
    %c6 = arith.constant 6 : index
    %73 = vector.load %arg3[%72, %c6] : memref<8x8xf32, #tpu.memory_space<vmem>>, vector<8x1xf32>
    tpu.vector_store %arg3[%72, %c6], %57 {strides = array<i32>} : memref<8x8xf32, #tpu.memory_space<vmem>>, vector<8x1xf32>,
    %74 = arith.index_cast %20 : i32 to index
    %c7 = arith.constant 7 : index
    %75 = vector.load %arg3[%74, %c7] : memref<8x8xf32, #tpu.memory_space<vmem>>, vector<8x1xf32>
    tpu.vector_store %arg3[%74, %c7], %59 {strides = array<i32>} : memref<8x8xf32, #tpu.memory_space<vmem>>, vector<8x1xf32>,
    %c1_i32_16 = arith.constant 1 : i32
    return
  }
  func.func @transform_0(%arg0: i32) -> (i32, i32) {
    %c0_i32 = arith.constant 0 : i32
    %c0_i32_0 = arith.constant 0 : i32
    return %arg0, %c0_i32 : i32, i32
  }
  func.func @transform_1(%arg0: i32) -> (i32, i32) {
    %c0_i32 = arith.constant 0 : i32
    %c0_i32_0 = arith.constant 0 : i32
    return %arg0, %c0_i32 : i32, i32
  }
  func.func @transform_2(%arg0: i32) -> (i32, i32) {
    %c0_i32 = arith.constant 0 : i32
    %c0_i32_0 = arith.constant 0 : i32
    return %arg0, %c0_i32 : i32, i32
  }
}

</mosaic_0001>

<llo_original>
// kernel: amsr2_specific_loss.1
$region0: #{amsr2_specific_loss.1}
  #allocation0 [shape = 'u32[]', space=smem, size = 0x4, offset = 0x4, fixed_abs, tag = 'smem constant byte address 0x4 - core index']
  #allocation1 [shape = 'u32[72,128]{1,0:T(1,128)}', space=vmem, size = 0x9000, scoped, tag = 'internal scratch']
  %s0 = inlined_call_operand.vmem [shape: f32[8,256], index: 0, kind: input, shape index: {}]
  %s1 = inlined_call_operand.vmem [shape: f32[8,256], index: 1, kind: input, shape index: {}]
  %s2 = inlined_call_operand.vmem [shape: f32[8,8], index: 2, kind: output, shape index: {}]
  %s3 = sld [smem:[#allocation0]]
  $region18: #{amsr2_specific_loss.1} parent=0
    _
  %s5 = ssub.s32 1, %s3
  %s6 = scalar_select 0, %s5, %s3
  // Predicated region
  $region2: #{amsr2_specific_loss.1} parent=0 // pred_check
    _
  $region3: #{amsr2_specific_loss.1} parent=0 // pred_check_branch
    %8 = sbr.rel (0) target = $region5
  $region4: #{amsr2_specific_loss.1} parent=0 // pred_region
    _
  $region5: #{amsr2_specific_loss.1} parent=0 // pred_fallthru
    _
  // Predicated region
  $region6: #{amsr2_specific_loss.1} parent=0 // pred_check
    _
  $region7: #{amsr2_specific_loss.1} parent=0 // pred_check_branch
    %10 = sbr.rel (0) target = $region9
  $region8: #{amsr2_specific_loss.1} parent=0 // pred_region
    _
  $region9: #{amsr2_specific_loss.1} parent=0 // pred_fallthru
    _
  %v11 = vlaneseq
  %v12 = vand.u32 %v11, 127
  %v13 = vadd.s32 %v12, 128
  %vm14 = vcmp.lt.s32.totalorder %v12, 0
  %v15 = vsub.s32 0, %v12
  %v16 = vsel %vm14, %v15, %v12
  %v17 = vshrl.u32 %v16, 4
  %v18 = vand.u32 %v16, 15
  %v19 = vsub.s32 0, %v18
  %v20 = vsel %vm14, %v19, %v18
  %vm21 = vcmp.lt.s32.totalorder %v13, 0
  %v22 = vsub.s32 0, %v13
  %v23 = vsel %vm21, %v22, %v13
  %v24 = vshrl.u32 %v23, 4
  %v25 = vand.u32 %v23, 15
  %v26 = vsub.s32 0, %v25
  %v27 = vsel %vm21, %v26, %v25
  %vm28 = vcmp.ne.s32.totalorder %v20, 0
  %vm29 = vcmp.ne.s32.totalorder %v27, 0
  %vm30 = vcmp.lt.s32.totalorder %v20, 0
  %vm31 = vcmp.lt.s32.totalorder %v27, 0
  %vm32 = vmand %vm30, %vm28
  %vm33 = vmand %vm31, %vm29
  %v34 = vadd.s32 %v20, 16
  %v35 = vadd.s32 %v27, 16
  %v36 = vsel %vm32, %v34, %v20
  %v37 = vsel %vm33, %v35, %v27
  %vm38 = vcmp.ne.s32.totalorder %v36, 15
  %vm39 = vcmp.ne.s32.totalorder %v37, 15
  %s40 = smul.u32 0, 2
  %s41 = smul.addr %s40, 8
  %s42 = scalar_lea.vmem %s0, %s41
  %v43 = vld [vmem:[%s42] sm:$0xff]
  %v44 = vld [vmem:[%s42 + $0x8] sm:$0xff]
  %s45 = smul.addr %s40, 8
  %s46 = scalar_lea.vmem %s1, %s45
  %v47 = vld [vmem:[%s46] sm:$0xff]
  %v48 = vld [vmem:[%s46 + $0x8] sm:$0xff]
  %v49 = vsub.f32 %v43, %v47
  %v50 = vsub.f32 %v44, %v48
  %v51 = vand.u32 2147483647, %v49
  %v52 = vand.u32 2147483647, %v50
  %55 = vrot.lane.b32.xlu0 %v49, 112
  %v56 = vpop.permute.xlu0 %55
  %57 = vrot.lane.b32.xlu0 %v50, 112
  %v58 = vpop.permute.xlu0 %57
  %vm59 = vcmask 916480
  %v60 = vsel %vm59, %v56, %v58
  %v63 = vsub.f32 %v49, %v60
  %v64 = vsub.f32 %v50, %v58
  %v65 = vand.u32 2147483647, %v63
  %v66 = vand.u32 2147483647, %v64
  %67 = vrot.lane.b32.xlu0 %v49, 127
  %v68 = vpop.permute.xlu0 %67
  %69 = vrot.lane.b32.xlu0 %v50, 127
  %v70 = vpop.permute.xlu0 %69
  %vm71 = vcmask 1039360
  %v72 = vsel %vm71, %v68, %v70
  %v75 = vsub.f32 %v49, %v72
  %v76 = vsub.f32 %v50, %v70
  %v77 = vand.u32 2147483647, %v75
  %v78 = vand.u32 2147483647, %v76
  %v79 = vsel %vm38, %v77, 0.0
  %v80 = vsel %vm39, %v78, 0.0
  %v81 = vand.u32 2147483647, %v43
  %v82 = vand.u32 2147483647, %v44
  %v83 = vsub.f32 %v81, 1.0
  %v84 = vsub.f32 %v82, 1.0
  %v85 = vmax.f32 %v83, 0.0
  %v86 = vmax.f32 %v84, 0.0
  %v87 = vadd.f32 %v51, %v52
  %88 = vadd.xlane.f32.xlu0 %v87
  %v89 = vpop.xlane.xlu0 %88
  %v90 = vsel %vm59, %v66, 0.0
  %v91 = vadd.f32 %v65, %v90
  %92 = vadd.xlane.f32.xlu0 %v91
  %v93 = vpop.xlane.xlu0 %92
  %v94 = vsel %vm71, %v80, 0.0
  %v95 = vadd.f32 %v79, %v94
  %96 = vadd.xlane.f32.xlu0 %v95
  %v97 = vpop.xlane.xlu0 %96
  %v98 = vadd.f32 %v43, %v44
  %99 = vadd.xlane.f32.xlu0 %v98
  %v100 = vpop.xlane.xlu0 %99
  %v101 = vmul.f32 %v43, %v43
  %v102 = vmul.f32 %v44, %v44
  %v103 = vadd.f32 %v101, %v102
  %104 = vadd.xlane.f32.xlu0 %v103
  %v105 = vpop.xlane.xlu0 %104
  %v106 = vadd.f32 %v47, %v48
  %107 = vadd.xlane.f32.xlu0 %v106
  %v108 = vpop.xlane.xlu0 %107
  %v109 = vmul.f32 %v47, %v47
  %v110 = vmul.f32 %v48, %v48
  %v111 = vadd.f32 %v109, %v110
  %112 = vadd.xlane.f32.xlu0 %v111
  %v113 = vpop.xlane.xlu0 %112
  %v114 = vadd.f32 %v85, %v86
  %115 = vadd.xlane.f32.xlu0 %v114
  %v116 = vpop.xlane.xlu0 %115
  %vm117 = vcmask 7168
  %118 = vst.msk [vmem:[%s2] sm:$0xff] %vm117, %v89
  %vm119 = vcmask 15368
  %120 = vst.msk [vmem:[%s2] sm:$0xff] %vm119, %v93
  %vm121 = vcmask 23568
  %122 = vst.msk [vmem:[%s2] sm:$0xff] %vm121, %v97
  %vm123 = vcmask 31768
  %124 = vst.msk [vmem:[%s2] sm:$0xff] %vm123, %v100
  %vm125 = vcmask 39968
  %126 = vst.msk [vmem:[%s2] sm:$0xff] %vm125, %v105
  %vm127 = vcmask 48168
  %128 = vst.msk [vmem:[%s2] sm:$0xff] %vm127, %v108
  %vm129 = vcmask 56368
  %130 = vst.msk [vmem:[%s2] sm:$0xff] %vm129, %v113
  %vm131 = vcmask 64568
  %132 = vst.msk [vmem:[%s2] sm:$0xff] %vm131, %v116
  // Predicated region
  $region10: #{amsr2_specific_loss.1} parent=0 // pred_check
    _
  $region11: #{amsr2_specific_loss.1} parent=0 // pred_check_branch
    %134 = sbr.rel (0) target = $region13
  $region12: #{amsr2_specific_loss.1} parent=0 // pred_region
    _
  $region13: #{amsr2_specific_loss.1} parent=0 // pred_fallthru
    _
  // Predicated region
  $region14: #{amsr2_specific_loss.1} parent=0 // pred_check
    _
  $region15: #{amsr2_specific_loss.1} parent=0 // pred_check_branch
    %136 = sbr.rel (0) target = $region17
  $region16: #{amsr2_specific_loss.1} parent=0 // pred_region
    _
  $region17: #{amsr2_specific_loss.1} parent=0 // pred_fallthru
    _

</llo_original>
